<compile_context>
chip_gen: v7x
topology: tpu7x:2x2x1
jax: 0.10.0
libtpu: 0.0.40
codegen_flags: <defaults>
</compile_context>

<pallas_src>
import functools

import jax
import jax.numpy as jnp
from jax.experimental import pallas as pl
from jax.experimental.pallas import tpu as pltpu


def _round_up(x, m):
    return ((x + m - 1) // m) * m


def ratio_loss_kernel(x_ref, t_ref, w_ref, num_ref, den_ref, *, n_rows, needs_mask):
    """One batch tile: per-class partials (num_c, den_c) of the weighted-mean CE."""
    x = x_ref[...].astype(jnp.float32)          # (T, C) logits
    t = t_ref[...]                              # (T, 1) int32 targets
    w = w_ref[...].astype(jnp.float32)          # (1, C) per-class weights

    tile_rows, n_classes = x.shape

    if needs_mask:
        row = jax.lax.broadcasted_iota(jnp.int32, (tile_rows, 1), 0)
        valid = (pl.program_id(0) * tile_rows + row) < n_rows     # (T, 1) bool
        # Zero padded rows before the transcendentals so stale padding data
        # can never inject NaN/Inf into the masked reductions.
        x = jnp.where(valid, x, 0.0)

    # Fused log-softmax pieces.  PyTorch does softmax -> log -> (CE's internal)
    # log_softmax; the second pass is mathematically the identity, so a single
    # pass suffices and is numerically safer (no log(0) for strong negatives).
    m = jnp.max(x, axis=1, keepdims=True)                             # (T, 1)
    xs = x - m                                                        # (T, C)
    lse = jnp.log(jnp.sum(jnp.exp(xs), axis=1, keepdims=True))        # (T, 1)

    # One-hot of the target column.
    # TODO(synk): out-of-range targets yield an all-zero one-hot row and are
    # silently dropped from num and den (PyTorch would raise instead).
    col = jax.lax.broadcasted_iota(jnp.int32, (tile_rows, n_classes), 1)
    hit = col == t
    if needs_mask:
        hit = hit & valid
    hit_f = hit.astype(jnp.float32)                                   # (T, C)

    # Row-major (sublane) reductions only: mostly elementwise vreg adds on the
    # VPU plus one sublane collapse, instead of extra per-row cross-lane XLU
    # reduces or a full reduce-to-scalar.  The final lane reduce is done in
    # the wrapper on the (grid_n, 1, C) partials.
    num_c = jnp.sum(hit_f * (xs - lse), axis=0, keepdims=True)        # (1, C)
    den_c = jnp.sum(hit_f, axis=0, keepdims=True)                     # (1, C)

    num_ref[...] = w * num_c      # per-class partial of  sum_i w[t_i] * z[i, t_i]
    den_ref[...] = w * den_c      # per-class partial of  sum_i w[t_i]


def _class_weights(pr, Hl, C, alpha, beta):
    # Forward hard-codes alpha = ones(C), beta = 0.1 * ones(C).
    pr_v = jnp.broadcast_to(jnp.asarray(pr, jnp.float32), (C,))
    hl_v = jnp.broadcast_to(jnp.asarray(Hl, jnp.float32), (C,))
    return ((alpha + beta * pr_v) * (alpha + beta * hl_v)).reshape(1, C)


def _ratio_loss_xla(inputs, targets, w):
    """Small-problem fast path: fused XLA expression (launch-overhead bound)."""
    N = inputs.shape[0]
    z = jax.nn.log_softmax(inputs.astype(jnp.float32), axis=1)
    idx = targets.reshape(N, 1).astype(jnp.int32)
    z_t = jnp.take_along_axis(z, idx, axis=1)[:, 0]
    w_t = w[0, targets]
    return -(jnp.sum(w_t * z_t) / jnp.sum(w_t))


def ratio_loss_fl(inputs, targets, pr, Hl, *, alpha=1.0, beta=0.1,
                  max_tile_rows=1024, use_pallas=None):
    """RatioLossFL.forward: weighted-mean CE of log(softmax(inputs)) vs targets."""
    N, C = inputs.shape
    w = _class_weights(pr, Hl, C, alpha, beta)

    # The nominal FEMNIST 8x62 batch is under one vreg of work: per-grid-step
    # overhead + launch dominates any Pallas tuning, so default to plain XLA.
    if use_pallas is None:
        use_pallas = N * C >= 64 * 1024
    if not use_pallas:
        return _ratio_loss_xla(inputs, targets, w)

    t2 = targets.reshape(N, 1).astype(jnp.int32)
    itemsize = jnp.dtype(inputs.dtype).itemsize

    # Tile rows rounded to the dtype's sublane packing (f32: 8, bf16: 16, i8: 32).
    sub = max(8, 32 // itemsize)

    # VMEM budget against the f32 working set, not just the native-dtype block:
    # 2x double-buffered input rows + ~5 live f32 (T, C_pad) temporaries
    # (upcast x, xs, exp(xs), one-hot, masked product).  Keeps large-C configs
    # inside v7x's 32 MiB scoped / 64 MiB physical VMEM.
    vmem_limit_bytes = 32 * 1024 * 1024
    c_pad = _round_up(C, 128)
    row_bytes = 2 * c_pad * itemsize + 5 * c_pad * 4
    budget = vmem_limit_bytes // 2            # leave half of scoped VMEM as headroom
    tn_cap = max(sub, (budget // row_bytes) // sub * sub)

    tn = min(max_tile_rows, tn_cap, _round_up(N, sub))
    # Guarantee >= 2 "parallel" tiles for mid-size batches so v7x's second
    # TensorCore isn't idle (no-op once N already spans multiple tiles).
    if N >= 256:
        tn = min(tn, _round_up(-(-N // 2), sub))

    grid_n = pl.cdiv(N, tn)
    needs_mask = (N % tn) != 0

    kernel = functools.partial(ratio_loss_kernel, n_rows=N, needs_mask=needs_mask)

    cost = pl.CostEstimate(
        flops=8 * N * C,
        transcendentals=N * C + N,
        bytes_accessed=N * C * itemsize + N * 4 + C * 4 + grid_n * C * 8,
    )

    num, den = pl.pallas_call(
        kernel,
        out_shape=(
            jax.ShapeDtypeStruct((grid_n, 1, C), jnp.float32),
            jax.ShapeDtypeStruct((grid_n, 1, C), jnp.float32),
        ),
        grid_spec=pltpu.PrefetchScalarGridSpec(
            num_scalar_prefetch=0,
            grid=(grid_n,),
            in_specs=[
                pl.BlockSpec((tn, C), lambda i: (i, 0)),     # logits (native dtype)
                pl.BlockSpec((tn, 1), lambda i: (i, 0)),     # targets
                pl.BlockSpec((1, C), lambda i: (0, 0)),      # class weights
            ],
            out_specs=[
                pl.BlockSpec((None, 1, C), lambda i: (i, 0, 0)),   # per-tile per-class num
                pl.BlockSpec((None, 1, C), lambda i: (i, 0, 0)),   # per-tile per-class den
            ],
        ),
        compiler_params=pltpu.CompilerParams(
            dimension_semantics=("parallel",),   # independent tiles -> dual-TC on v7x
            vmem_limit_bytes=vmem_limit_bytes,
        ),
        cost_estimate=cost,
    )(inputs, t2, w)

    # Tiny cross-tile / cross-class combine; keeping per-class partials lets the
    # kernel skip the reduce-to-scalar and the grid stay fully parallel.
    return -(jnp.sum(num) / jnp.sum(den))


def ratio_loss_fl_ref(inputs, targets, pr, Hl, alpha=1.0, beta=0.1):
    """Pure-JAX reference mirroring the PyTorch module literally."""
    N, C = inputs.shape
    x = inputs.astype(jnp.float32)
    p = jax.nn.softmax(x, axis=1)
    log_p = jnp.log(p)
    z = jax.nn.log_softmax(log_p, axis=1)       # CE's internal log_softmax
    w = (alpha + beta * jnp.broadcast_to(jnp.asarray(pr, jnp.float32), (C,))) * (
        alpha + beta * jnp.broadcast_to(jnp.asarray(Hl, jnp.float32), (C,)))
    z_t = z[jnp.arange(N), targets]
    w_t = w[targets]
    return -jnp.sum(w_t * z_t) / jnp.sum(w_t)


if __name__ == "__main__":
    key = jax.random.PRNGKey(0)
    k1, k2, k3, k4 = jax.random.split(key, 4)

    # FEMNIST-like small shapes: batch N=8, class_num C=62.
    N, C = 8, 62
    inputs = jax.random.normal(k1, (N, C), dtype=jnp.float32)
    targets = jax.random.randint(k2, (N,), 0, C, dtype=jnp.int32)
    pr = jax.random.uniform(k3, (C,), dtype=jnp.float32)   # participation ratios
    Hl = jax.random.uniform(k4, (C,), dtype=jnp.float32)   # per-class Hl factors

    ref = ratio_loss_fl_ref(inputs, targets, pr, Hl)

    # Force the Pallas path on the nominal shape (auto mode would fast-path it).
    loss = ratio_loss_fl(inputs, targets, pr, Hl, use_pallas=True)
    jax.block_until_ready(loss)
    assert jnp.allclose(loss, ref, atol=1e-4, rtol=1e-4), (loss, ref)

    # Auto mode (small-problem XLA fast path) must agree too.
    loss_auto = ratio_loss_fl(inputs, targets, pr, Hl)
    jax.block_until_ready(loss_auto)
    assert jnp.allclose(loss_auto, ref, atol=1e-4, rtol=1e-4), (loss_auto, ref)

    # Multi-tile + ragged-tail case (still small): exercises the >=2-tile split
    # and the masked partial-block path.
    N2 = 300
    k5, k6 = jax.random.split(k1)
    inputs2 = jax.random.normal(k5, (N2, C), dtype=jnp.float32)
    targets2 = jax.random.randint(k6, (N2,), 0, C, dtype=jnp.int32)
    loss2 = ratio_loss_fl(inputs2, targets2, pr, Hl, use_pallas=True)
    jax.block_until_ready(loss2)
    ref2 = ratio_loss_fl_ref(inputs2, targets2, pr, Hl)
    assert jnp.allclose(loss2, ref2, atol=1e-4, rtol=1e-4), (loss2, ref2)

    print("KERNEL_OK")
</pallas_src>

<mosaic_0001>
module attributes {stable_mosaic.version = 11 : i64} {
  func.func @ratio_loss_kernel(%arg0: i32, %arg1: memref<8x62xf32, #tpu.memory_space<vmem>>, %arg2: memref<8x1xi32, #tpu.memory_space<vmem>>, %arg3: memref<1x62xf32, #tpu.memory_space<vmem>>, %arg4: memref<1x1x62xf32, #tpu.memory_space<vmem>>, %arg5: memref<1x1x62xf32, #tpu.memory_space<vmem>>) attributes {dimension_semantics = [#tpu.dimension_semantics<parallel>], iteration_bounds = array<i64: 1>, scalar_prefetch = 0 : i64, scratch_operands = 0 : i64, tpu.core_type = #tpu.core_type<tc>, window_params = [{transform_indices = @transform_0, window_bounds = array<i64: 8, 62>}, {transform_indices = @transform_1, window_bounds = array<i64: 8, 1>}, {pipeline_mode = #tpu.pipeline_mode<synchronous>, transform_indices = @transform_2, window_bounds = array<i64: 1, 62>}, {transform_indices = @transform_3, window_bounds = array<i64: 1, 1, 62>}, {transform_indices = @transform_4, window_bounds = array<i64: 1, 1, 62>}]} {
    %c0 = arith.constant 0 : index
    %c0_0 = arith.constant 0 : index
    %0 = vector.load %arg1[%c0, %c0_0] : memref<8x62xf32, #tpu.memory_space<vmem>>, vector<8x62xf32>
    %c0_1 = arith.constant 0 : index
    %c0_2 = arith.constant 0 : index
    %1 = vector.load %arg2[%c0_1, %c0_2] : memref<8x1xi32, #tpu.memory_space<vmem>>, vector<8x1xi32>
    %c0_3 = arith.constant 0 : index
    %c0_4 = arith.constant 0 : index
    %2 = vector.load %arg3[%c0_3, %c0_4] : memref<1x62xf32, #tpu.memory_space<vmem>>, vector<1x62xf32>
    %cst = arith.constant dense<0xFF800000> : vector<8xf32>
    %3 = vector.multi_reduction <maximumf>, %0, %cst [1] : vector<8x62xf32> to vector<8xf32>
    %4 = vector.shape_cast %3 : vector<8xf32> to vector<8x1xf32>
    %5 = vector.broadcast %4 : vector<8x1xf32> to vector<8x62xf32>
    %6 = arith.subf %0, %5 : vector<8x62xf32>
    %7 = math.exp %6 : vector<8x62xf32>
    %cst_5 = arith.constant dense<0.000000e+00> : vector<8xf32>
    %8 = vector.multi_reduction <add>, %7, %cst_5 [1] : vector<8x62xf32> to vector<8xf32>
    %9 = vector.shape_cast %8 : vector<8xf32> to vector<8x1xf32>
    %10 = math.log %9 : vector<8x1xf32>
    %11 = tpu.iota {dimensions = array<i32: 1>} : vector<8x62xi32>
    %12 = vector.broadcast %1 : vector<8x1xi32> to vector<8x62xi32>
    %13 = arith.cmpi eq, %11, %12 : vector<8x62xi32>
    %14 = arith.extui %13 : vector<8x62xi1> to vector<8x62xi32>
    %15 = arith.sitofp %14 : vector<8x62xi32> to vector<8x62xf32>
    %16 = vector.broadcast %10 : vector<8x1xf32> to vector<8x62xf32>
    %17 = arith.subf %6, %16 : vector<8x62xf32>
    %18 = arith.mulf %15, %17 : vector<8x62xf32>
    %cst_6 = arith.constant dense<0.000000e+00> : vector<62xf32>
    %19 = vector.multi_reduction <add>, %18, %cst_6 [0] : vector<8x62xf32> to vector<62xf32>
    %20 = vector.shape_cast %19 : vector<62xf32> to vector<1x62xf32>
    %cst_7 = arith.constant dense<0.000000e+00> : vector<62xf32>
    %21 = vector.multi_reduction <add>, %15, %cst_7 [0] : vector<8x62xf32> to vector<62xf32>
    %22 = vector.shape_cast %21 : vector<62xf32> to vector<1x62xf32>
    %23 = arith.mulf %2, %20 : vector<1x62xf32>
    %c0_8 = arith.constant 0 : index
    %c0_9 = arith.constant 0 : index
    %c0_10 = arith.constant 0 : index
    %24 = vector.load %arg4[%c0_8, %c0_9, %c0_10] : memref<1x1x62xf32, #tpu.memory_space<vmem>>, vector<1x1x62xf32>
    %25 = vector.shape_cast %24 : vector<1x1x62xf32> to vector<1x62xf32>
    %26 = vector.shape_cast %23 : vector<1x62xf32> to vector<1x1x62xf32>
    tpu.vector_store %arg4[%c0_8, %c0_9, %c0_10], %26 {strides = array<i32>} : memref<1x1x62xf32, #tpu.memory_space<vmem>>, vector<1x1x62xf32>,
    %27 = arith.mulf %2, %22 : vector<1x62xf32>
    %c0_11 = arith.constant 0 : index
    %c0_12 = arith.constant 0 : index
    %c0_13 = arith.constant 0 : index
    %28 = vector.load %arg5[%c0_11, %c0_12, %c0_13] : memref<1x1x62xf32, #tpu.memory_space<vmem>>, vector<1x1x62xf32>
    %29 = vector.shape_cast %28 : vector<1x1x62xf32> to vector<1x62xf32>
    %30 = vector.shape_cast %27 : vector<1x62xf32> to vector<1x1x62xf32>
    tpu.vector_store %arg5[%c0_11, %c0_12, %c0_13], %30 {strides = array<i32>} : memref<1x1x62xf32, #tpu.memory_space<vmem>>, vector<1x1x62xf32>,
    return
  }
  func.func @transform_0(%arg0: i32) -> (i32, i32) {
    %c0_i32 = arith.constant 0 : i32
    %c0_i32_0 = arith.constant 0 : i32
    return %arg0, %c0_i32 : i32, i32
  }
  func.func @transform_1(%arg0: i32) -> (i32, i32) {
    %c0_i32 = arith.constant 0 : i32
    %c0_i32_0 = arith.constant 0 : i32
    return %arg0, %c0_i32 : i32, i32
  }
  func.func @transform_2(%arg0: i32) -> (i32, i32) {
    %c0_i32 = arith.constant 0 : i32
    %c0_i32_0 = arith.constant 0 : i32
    %c0_i32_1 = arith.constant 0 : i32
    return %c0_i32, %c0_i32_0 : i32, i32
  }
  func.func @transform_3(%arg0: i32) -> (i32, i32, i32) {
    %c0_i32 = arith.constant 0 : i32
    %c0_i32_0 = arith.constant 0 : i32
    %c0_i32_1 = arith.constant 0 : i32
    return %arg0, %c0_i32, %c0_i32_0 : i32, i32, i32
  }
  func.func @transform_4(%arg0: i32) -> (i32, i32, i32) {
    %c0_i32 = arith.constant 0 : i32
    %c0_i32_0 = arith.constant 0 : i32
    %c0_i32_1 = arith.constant 0 : i32
    return %arg0, %c0_i32, %c0_i32_0 : i32, i32, i32
  }
}

</mosaic_0001>

<llo_original>
// kernel: tpu_custom_call.1
$region0: #{tpu_custom_call.1}
  #allocation0 [shape = 'u32[]', space=smem, size = 0x4, offset = 0x4, fixed_abs, tag = 'smem constant byte address 0x4 - core index']
  #allocation1 [shape = 'u32[144,128]{1,0:T(1,128)}', space=vmem, size = 0x12000, scoped, tag = 'internal scratch']
  %s0 = inlined_call_operand.vmem [shape: f32[8,62], index: 0, kind: input, shape index: {}]
  %s1 = inlined_call_operand.vmem [shape: s32[8,1], index: 1, kind: input, shape index: {}]
  %s2 = inlined_call_operand.vmem [shape: f32[1,62], index: 2, kind: input, shape index: {}]
  %s3 = inlined_call_operand.hbm [shape: f32[1,1,62], index: 3, kind: output, shape index: {0}]
  %s4 = inlined_call_operand.hbm [shape: f32[1,1,62], index: 4, kind: output, shape index: {1}]
  %5 = xla_tuple %s3, %s4
  %s6 = sld [smem:[#allocation0]]
  $region30: #{tpu_custom_call.1} parent=0
    _
  %s8 = ssub.s32 1, %s6
  %s9 = scalar_select 0, %s8, %s6
  $region1: #{tpu_custom_call.1} parent=0
    #allocation2 [shape = 'u8[512]{0}', space=vmem, size = 0x400, scoped, tag = 'output window, operand 0, single buffered']
    #allocation3 [shape = 's32[1]{0}', space=sflag, size = 0x4, scoped, tag = 'scoped memory for tpu_custom_call.1']
    #allocation4 [shape = 'u8[512]{0}', space=vmem, size = 0x400, scoped, tag = 'output window, operand 1, single buffered']
    #allocation5 [shape = 's32[1]{0}', space=sflag, size = 0x4, scoped, tag = 'scoped memory for tpu_custom_call.1']
    %10 = vsyncpa [#allocation3], 0
    %11 = vsyncpa [#allocation5], 0
    // Predicated region
    $region2: #{tpu_custom_call.1} parent=1 // pred_check
      _
    $region3: #{tpu_custom_call.1} parent=1 // pred_check_branch
      %13 = sbr.rel (0) target = $region5
    $region4: #{tpu_custom_call.1} parent=1 // pred_region
      _
    $region5: #{tpu_custom_call.1} parent=1 // pred_fallthru
      _
    // Predicated region
    $region6: #{tpu_custom_call.1} parent=1 // pred_check
      _
    $region7: #{tpu_custom_call.1} parent=1 // pred_check_branch
      %15 = sbr.rel (0) target = $region9
    $region8: #{tpu_custom_call.1} parent=1 // pred_region
      _
    $region9: #{tpu_custom_call.1} parent=1 // pred_fallthru
      _
    // Predicated region
    $region10: #{tpu_custom_call.1} parent=1 // pred_check
      _
    $region11: #{tpu_custom_call.1} parent=1 // pred_check_branch
      %17 = sbr.rel (0) target = $region13
    $region12: #{tpu_custom_call.1} parent=1 // pred_region
      _
    $region13: #{tpu_custom_call.1} parent=1 // pred_fallthru
      _
    %v18 = vld [vmem:[%s0] sm:$0xff]
    %v19 = vld [vmem:[%s1] sm:$0xff]
    %v20 = vld [vmem:[%s2] sm:$0x1]
    %vm21 = vcmask 506880
    %v22 = vsel %vm21, %v18, -inf
    %23 = vmax.xlane.f32.xlu0 %v22
    %v24 = vpop.xlane.xlu0 %23
    %v25 = vsub.f32 %v18, %v24
    %v26 = vmul.f32 %v25, 1.442695
    %v27 = vpow.pop %v26
    %v28 = vsel %vm21, %v27, 0.0
    %29 = vadd.xlane.f32.xlu0 %v28
    %v30 = vpop.xlane.xlu0 %29
    %v31 = vlog2.pop %v30
    %v32 = vmul.f32 %v31, 0.6931472
    %v33 = vlaneseq
    %v34 = vand.u32 %v33, 127
    %35 = vset.pattern.permute.xlu0 0
    %36 = vperm.xlu0 %35, %v19
    %v37 = vpop.permute.xlu0 %36
    %vm38 = vcmp.eq.s32.totalorder %v34, %v37
    %v39 = vsel %vm38, 1, 0
    %v40 = vcvt.s32.f32 %v39
    %v41 = vsub.f32 %v25, %v32
    %v42 = vmul.f32 %v40, %v41
    %v43 = vsel %vm21, %v42, 0.0
    %v44 = vrot.slane %v43, 4
    %v45 = vadd.f32 %v43, %v44
    %v46 = vrot.slane %v45, 2
    %v47 = vadd.f32 %v45, %v46
    %v48 = vrot.slane %v47, 1
    %v49 = vadd.f32 %v47, %v48
    %v50 = vsel %vm21, %v40, 0.0
    %v51 = vrot.slane %v50, 4
    %v52 = vadd.f32 %v50, %v51
    %v53 = vrot.slane %v52, 2
    %v54 = vadd.f32 %v52, %v53
    %v55 = vrot.slane %v54, 1
    %v56 = vadd.f32 %v54, %v55
    %v57 = vmul.f32 %v20, %v49
    %vm58 = vcmask 499712
    %59 = vst.msk [vmem:[#allocation2] sm:$0x1] %vm58, %v57
    %v60 = vmul.f32 %v20, %v56
    %61 = vst.msk [vmem:[#allocation4] sm:$0x1] %vm58, %v60
    // Predicated region
    $region14: #{tpu_custom_call.1} parent=1 // pred_check
      _
    $region15: #{tpu_custom_call.1} parent=1 // pred_check_branch
      %63 = sbr.rel (0) target = $region17
    $region16: #{tpu_custom_call.1} parent=1 // pred_region
      %s65 = ssub.s32 16, 16
      %66 = vsyncadd [#allocation3], %s65
      %s68 = sshll.u32 [#allocation2], 4
      %s69 = int_to_ptr.vmem [resolvable:$true] %s68
      %71 = dma.vmem_to_hbm [thread:$0]  %s69, 16, %s3, [#allocation3]
    $region17: #{tpu_custom_call.1} parent=1 // pred_fallthru
      _
    // Predicated region
    $region18: #{tpu_custom_call.1} parent=1 // pred_check
      _
    $region19: #{tpu_custom_call.1} parent=1 // pred_check_branch
      %73 = sbr.rel (0) target = $region21
    $region20: #{tpu_custom_call.1} parent=1 // pred_region
      %s75 = ssub.s32 16, 16
      %76 = vsyncadd [#allocation5], %s75
      %s78 = sshll.u32 [#allocation4], 4
      %s79 = int_to_ptr.vmem [resolvable:$true] %s78
      %81 = dma.vmem_to_hbm [thread:$0]  %s79, 16, %s4, [#allocation5]
    $region21: #{tpu_custom_call.1} parent=1 // pred_fallthru
      _
    // Predicated region
    $region22: #{tpu_custom_call.1} parent=1 // pred_check
      _
    $region23: #{tpu_custom_call.1} parent=1 // pred_check_branch
      %83 = sbr.rel (0) target = $region25
    $region24: #{tpu_custom_call.1} parent=1 // pred_region
      %84 = dma.done [#allocation3], 16
    $region25: #{tpu_custom_call.1} parent=1 // pred_fallthru
      _
    // Predicated region
    $region26: #{tpu_custom_call.1} parent=1 // pred_check
      _
    $region27: #{tpu_custom_call.1} parent=1 // pred_check_branch
      %86 = sbr.rel (0) target = $region29
    $region28: #{tpu_custom_call.1} parent=1 // pred_region
      %87 = dma.done [#allocation5], 16
    $region29: #{tpu_custom_call.1} parent=1 // pred_fallthru
      _
    %88 = vsyncpa [#allocation3], 1
    %89 = vsyncpa [#allocation5], 1

</llo_original>
